<compile_context>
chip_gen: v5e
topology: v5e:2x2
jax: 0.10.0
libtpu: 0.0.40
codegen_flags: <defaults>
</compile_context>

<pallas_src>
import functools

import jax
import jax.numpy as jnp
from jax.experimental import pallas as pl
from jax.experimental.pallas import tpu as pltpu

LANES = 128
BLOCK_BYTE_BUDGET = 4 << 20   # per-input block; 2 inputs x 2 buffers = 16 MiB


def _round_up(x, m):
    return ((x + m - 1) // m) * m


def _num_tensorcores():
    """Best-effort detection of TensorCores addressable by one pallas_call."""
    try:
        dev = jax.devices()[0]
        if dev.platform != "tpu":
            return 1
        kind = (getattr(dev, "device_kind", "") or "").lower()
        # v7x exposes 2 TensorCores per chip; v5e / v6e have a single TC.
        if "v7" in kind or "7x" in kind:
            return 2
    except Exception:
        pass
    return 1


def _plan_blocks(rows, itemsize, max_block_rows, num_cores):
    """Returns (num_outer, inner, block_rows, mask_rows)."""
    granule = max(8, 32 // itemsize)          # f32: 8, bf16: 16, int8/fp8: 32
    budget_rows = max(granule,
                      (BLOCK_BYTE_BUDGET // (LANES * itemsize)) // granule * granule)
    if max_block_rows is not None:
        budget_rows = max(granule,
                          min(budget_rows, (max_block_rows // granule) * granule))

    if rows <= budget_rows:
        # Whole slab in one block (full-dim block, no (8,128) constraint).
        return 1, 1, rows, None

    block_rows = budget_rows
    num_blocks = pl.cdiv(rows, block_rows)
    num_outer = 2 if (num_cores >= 2 and num_blocks >= 2) else 1
    inner = pl.cdiv(num_blocks, num_outer)

    if num_outer > 1:
        # Re-balance block_rows so the (num_outer, inner) grid covers the rows
        # with no wholly-phantom block (at most one ragged tail block).
        bal = _round_up(pl.cdiv(rows, num_outer * inner), granule)
        if (num_outer * inner - 1) * bal < rows:
            block_rows = bal
        else:
            num_outer, inner = 1, num_blocks

    total_blocks = num_outer * inner
    tail = rows - (total_blocks - 1) * block_rows     # valid rows in last block
    mask_rows = None if tail == block_rows else tail
    return num_outer, inner, block_rows, mask_rows


def _mse_kernel(a_ref, b_ref, out_ref, acc_ref, *, mask_rows, last_outer):
    i = pl.program_id(0)
    j = pl.program_id(1)

    # Re-init the per-lane accumulator at the start of every inner sweep
    # (each TensorCore owns its own scratch / output slot).
    @pl.when(j == 0)
    def _():
        acc_ref[...] = jnp.zeros_like(acc_ref)

    a = a_ref[...].astype(jnp.float32)
    b = b_ref[...].astype(jnp.float32)
    d = a - b
    d2 = d * d

    if mask_rows is None:
        acc_ref[...] += jnp.sum(d2, axis=0, keepdims=True)
    else:
        # Only the globally-last block is ragged; gate the mask work to it so
        # full blocks pay no iota/compare/select.
        is_ragged = jnp.logical_and(i == last_outer, j == pl.num_programs(1) - 1)

        @pl.when(is_ragged)
        def _():
            row_ids = jax.lax.broadcasted_iota(jnp.int32, d2.shape, 0)
            # NOTE: keep the select (jnp.where) — a multiply-by-mask would
            # propagate NaN/Inf from the undefined out-of-range rows.
            acc_ref[...] += jnp.sum(jnp.where(row_ids < mask_rows, d2, 0.0),
                                    axis=0, keepdims=True)

        @pl.when(jnp.logical_not(is_ragged))
        def _():
            acc_ref[...] += jnp.sum(d2, axis=0, keepdims=True)

    # Single cross-lane reduce + scalar store only on the last inner step.
    @pl.when(j == pl.num_programs(1) - 1)
    def _():
        out_ref[0, 0] = jnp.sum(acc_ref[...])


def _mse_partials(a2, b2, num_outer, inner, block_rows, mask_rows, *,
                  core_parallel, itemsize):
    kernel = functools.partial(_mse_kernel,
                               mask_rows=mask_rows,
                               last_outer=num_outer - 1)

    if num_outer > 1:
        outer_sem = pltpu.CORE_PARALLEL if core_parallel else pltpu.PARALLEL
    else:
        outer_sem = pltpu.ARBITRARY

    # 2 inputs x 2 pipeline buffers + headroom; clamp to [16, 32] MiB so it is
    # valid on every generation (v5e/v6e default 16/32 MiB, v7x 32 MiB / 64 MiB
    # physical per TC).
    block_bytes = block_rows * LANES * itemsize
    vmem_limit = int(min(max(4 * block_bytes + (4 << 20), 16 << 20), 32 << 20))

    def in_map(i, j):
        return (i * inner + j, 0)

    return pl.pallas_call(
        kernel,
        out_shape=jax.ShapeDtypeStruct((num_outer, 1), jnp.float32),
        grid_spec=pltpu.PrefetchScalarGridSpec(
            num_scalar_prefetch=0,
            grid=(num_outer, inner),
            in_specs=[
                pl.BlockSpec((block_rows, LANES), in_map),
                pl.BlockSpec((block_rows, LANES), in_map),
            ],
            out_specs=pl.BlockSpec((1, 1), lambda i, j: (i, 0),
                                   memory_space=pltpu.SMEM),
            scratch_shapes=[pltpu.VMEM((1, LANES), jnp.float32)],
        ),
        compiler_params=pltpu.CompilerParams(
            dimension_semantics=(outer_sem, pltpu.ARBITRARY),
            vmem_limit_bytes=vmem_limit,
        ),
    )(a2, b2)


def mse_loss_pallas(img1, img2, alpha=0.9, max_block_rows=None):
    assert img1.shape == img2.shape, "MSELoss requires matching shapes"
    n_true = img1.size

    a = jnp.asarray(img1).reshape(-1)
    b = jnp.asarray(img2).reshape(-1)
    if a.dtype != b.dtype:
        dt = jnp.promote_types(a.dtype, b.dtype)
        a = a.astype(dt)
        b = b.astype(dt)

    # Lane-dense [rows, 128] slab.  Common image sizes are multiples of 128 ->
    # no pad copy in that path.
    # TODO(synk): a sub-128 ragged tail still forces a padded copy of the flat
    # inputs; padding both with zeros keeps the squared-diff sum exact.
    pad_flat = (-n_true) % LANES
    if pad_flat:
        a = jnp.pad(a, (0, pad_flat))
        b = jnp.pad(b, (0, pad_flat))
    a2 = a.reshape(-1, LANES)
    b2 = b.reshape(-1, LANES)
    rows = a2.shape[0]
    itemsize = jnp.dtype(a2.dtype).itemsize

    num_cores = _num_tensorcores()
    plan = _plan_blocks(rows, itemsize, max_block_rows, num_cores)
    try:
        partials = _mse_partials(a2, b2, *plan,
                                 core_parallel=(plan[0] > 1),
                                 itemsize=itemsize)
    except Exception:
        # Unknown setup rejected the 2-TensorCore lowering: re-plan for a
        # single sequential sweep (always valid).
        if plan[0] == 1:
            raise
        plan = _plan_blocks(rows, itemsize, max_block_rows, 1)
        partials = _mse_partials(a2, b2, *plan,
                                 core_parallel=False,
                                 itemsize=itemsize)

    return jnp.sum(partials) * (alpha / n_true)


def _reference(img1, img2, alpha=0.9):
    d = img1.astype(jnp.float32) - img2.astype(jnp.float32)
    return alpha * jnp.mean(d * d)


if __name__ == "__main__":
    key = jax.random.PRNGKey(0)
    k1, k2, k3, k4, k5, k6 = jax.random.split(key, 6)

    # Main case: NCHW images, size is a multiple of 128 (pad-free, single-block path).
    img1 = jax.random.normal(k1, (2, 4, 16, 16), dtype=jnp.float32)
    img2 = jax.random.normal(k2, (2, 4, 16, 16), dtype=jnp.float32)
    loss = mse_loss_pallas(img1, img2, alpha=0.9)
    jax.block_until_ready(loss)
    ref = _reference(img1, img2, alpha=0.9)
    assert jnp.allclose(loss, ref, rtol=1e-5, atol=1e-6), (loss, ref)

    # Multi-block pipelined path (forced small block for test).
    loss2 = mse_loss_pallas(img1, img2, alpha=0.9, max_block_rows=8)
    jax.block_until_ready(loss2)
    assert jnp.allclose(loss2, ref, rtol=1e-5, atol=1e-6), (loss2, ref)

    # Ragged rows -> gated in-kernel mask on the last block only.
    img3 = jax.random.normal(k3, (2, 4, 16, 18), dtype=jnp.float32)
    img4 = jax.random.normal(k4, (2, 4, 16, 18), dtype=jnp.float32)
    loss3 = mse_loss_pallas(img3, img4, alpha=0.9, max_block_rows=8)
    jax.block_until_ready(loss3)
    ref3 = _reference(img3, img4, alpha=0.9)
    assert jnp.allclose(loss3, ref3, rtol=1e-5, atol=1e-6), (loss3, ref3)

    # Size not a multiple of 128 -> minimal flat-pad fallback path.
    img5 = jax.random.normal(k5, (2, 3, 7, 11), dtype=jnp.float32)
    img6 = jax.random.normal(k6, (2, 3, 7, 11), dtype=jnp.float32)
    loss4 = mse_loss_pallas(img5, img6, alpha=0.9)
    jax.block_until_ready(loss4)
    ref4 = _reference(img5, img6, alpha=0.9)
    assert jnp.allclose(loss4, ref4, rtol=1e-5, atol=1e-6), (loss4, ref4)

    # bf16 inputs: streamed at half HBM traffic, cast to f32 in-register,
    # dtype-aware (16-row granule) block sizing.
    img7 = jax.random.normal(k1, (2, 4, 16, 16), dtype=jnp.bfloat16)
    img8 = jax.random.normal(k2, (2, 4, 16, 16), dtype=jnp.bfloat16)
    loss5 = mse_loss_pallas(img7, img8, alpha=0.9, max_block_rows=16)
    jax.block_until_ready(loss5)
    ref5 = _reference(img7, img8, alpha=0.9)
    assert jnp.allclose(loss5, ref5, rtol=1e-5, atol=1e-6), (loss5, ref5)

    print("KERNEL_OK")
</pallas_src>

<mosaic_0001>
module attributes {stable_mosaic.version = 11 : i64} {
  func.func @_mse_kernel(%arg0: i32, %arg1: i32, %arg2: memref<16x128xf32, #tpu.memory_space<vmem>>, %arg3: memref<16x128xf32, #tpu.memory_space<vmem>>, %arg4: memref<1x1xf32, #tpu.memory_space<smem>>, %arg5: memref<1x128xf32, #tpu.memory_space<vmem>>) attributes {dimension_semantics = [#tpu.dimension_semantics<arbitrary>, #tpu.dimension_semantics<arbitrary>], iteration_bounds = array<i64: 1, 1>, scalar_prefetch = 0 : i64, scratch_operands = 1 : i64, tpu.core_type = #tpu.core_type<tc>, window_params = [{transform_indices = @transform_0, window_bounds = array<i64: 16, 128>}, {transform_indices = @transform_1, window_bounds = array<i64: 16, 128>}, {transform_indices = @transform_2, window_bounds = array<i64: 1, 1>}]} {
    %c0_i32 = arith.constant 0 : i32
    %0 = arith.cmpi eq, %arg1, %c0_i32 : i32
    %1 = arith.extui %0 : i1 to i32
    %c0_i32_0 = arith.constant 0 : i32
    %2 = arith.cmpi ne, %1, %c0_i32_0 : i32
    scf.if %2 {
      %cst_10 = arith.constant 0.000000e+00 : f32
      %15 = vector.broadcast %cst_10 : f32 to vector<1x128xf32>
      %c0_11 = arith.constant 0 : index
      %c0_12 = arith.constant 0 : index
      %16 = vector.load %arg5[%c0_11, %c0_12] : memref<1x128xf32, #tpu.memory_space<vmem>>, vector<1x128xf32>
      tpu.vector_store %arg5[%c0_11, %c0_12], %15 {strides = array<i32>} : memref<1x128xf32, #tpu.memory_space<vmem>>, vector<1x128xf32>,
    } else {
    }
    %c0 = arith.constant 0 : index
    %c0_1 = arith.constant 0 : index
    %3 = vector.load %arg2[%c0, %c0_1] : memref<16x128xf32, #tpu.memory_space<vmem>>, vector<16x128xf32>
    %c0_2 = arith.constant 0 : index
    %c0_3 = arith.constant 0 : index
    %4 = vector.load %arg3[%c0_2, %c0_3] : memref<16x128xf32, #tpu.memory_space<vmem>>, vector<16x128xf32>
    %5 = arith.subf %3, %4 : vector<16x128xf32>
    %6 = arith.mulf %5, %5 : vector<16x128xf32>
    %c0_4 = arith.constant 0 : index
    %c0_5 = arith.constant 0 : index
    %7 = vector.load %arg5[%c0_4, %c0_5] : memref<1x128xf32, #tpu.memory_space<vmem>>, vector<1x128xf32>
    %cst = arith.constant dense<0.000000e+00> : vector<128xf32>
    %8 = vector.multi_reduction <add>, %6, %cst [0] : vector<16x128xf32> to vector<128xf32>
    %9 = vector.shape_cast %8 : vector<128xf32> to vector<1x128xf32>
    %10 = arith.addf %7, %9 : vector<1x128xf32>
    %c0_6 = arith.constant 0 : index
    %c0_7 = arith.constant 0 : index
    %11 = vector.load %arg5[%c0_6, %c0_7] : memref<1x128xf32, #tpu.memory_space<vmem>>, vector<1x128xf32>
    tpu.vector_store %arg5[%c0_6, %c0_7], %10 {strides = array<i32>} : memref<1x128xf32, #tpu.memory_space<vmem>>, vector<1x128xf32>,
    %c0_i32_8 = arith.constant 0 : i32
    %12 = arith.cmpi eq, %arg1, %c0_i32_8 : i32
    %13 = arith.extui %12 : i1 to i32
    %c0_i32_9 = arith.constant 0 : i32
    %14 = arith.cmpi ne, %13, %c0_i32_9 : i32
    scf.if %14 {
      %c0_10 = arith.constant 0 : index
      %c0_11 = arith.constant 0 : index
      %15 = vector.load %arg5[%c0_10, %c0_11] : memref<1x128xf32, #tpu.memory_space<vmem>>, vector<1x128xf32>
      %16 = vector.shape_cast %15 : vector<1x128xf32> to vector<1x1x128xf32>
      %cst_12 = arith.constant dense<0.000000e+00> : vector<1xf32>
      %17 = vector.multi_reduction <add>, %16, %cst_12 [1, 2] : vector<1x1x128xf32> to vector<1xf32>
      %18 = vector.shape_cast %17 : vector<1xf32> to vector<1x1x1xf32>
      %19 = vector.extract %18[0, 0, 0] : f32 from vector<1x1x1xf32>
      %c0_13 = arith.constant 0 : index
      %c0_14 = arith.constant 0 : index
      %20 = memref.load %arg4[%c0_13, %c0_14] : memref<1x1xf32, #tpu.memory_space<smem>>
      memref.store %19, %arg4[%c0_13, %c0_14] : memref<1x1xf32, #tpu.memory_space<smem>>
    } else {
    }
    return
  }
  func.func @transform_0(%arg0: i32, %arg1: i32) -> (i32, i32) {
    %c1_i32 = arith.constant 1 : i32
    %0 = arith.muli %arg0, %c1_i32 : i32
    %1 = arith.addi %0, %arg1 : i32
    %c0_i32 = arith.constant 0 : i32
    %c0_i32_0 = arith.constant 0 : i32
    return %1, %c0_i32 : i32, i32
  }
  func.func @transform_1(%arg0: i32, %arg1: i32) -> (i32, i32) {
    %c1_i32 = arith.constant 1 : i32
    %0 = arith.muli %arg0, %c1_i32 : i32
    %1 = arith.addi %0, %arg1 : i32
    %c0_i32 = arith.constant 0 : i32
    %c0_i32_0 = arith.constant 0 : i32
    return %1, %c0_i32 : i32, i32
  }
  func.func @transform_2(%arg0: i32, %arg1: i32) -> (i32, i32) {
    %c0_i32 = arith.constant 0 : i32
    %c0_i32_0 = arith.constant 0 : i32
    return %arg0, %c0_i32 : i32, i32
  }
}

</mosaic_0001>

<llo_original>
// kernel: tpu_custom_call.1
$region0: #{tpu_custom_call.1}
  #allocation0 [shape = 'u32[]', space=smem, size = 0x4, offset = 0x4, fixed_abs, tag = 'smem constant byte address 0x4 - core index']
  #allocation1 [shape = 'u32[72,128]{1,0:T(1,128)}', space=vmem, size = 0x9000, scoped, tag = 'internal scratch']
  #allocation2 [shape = 'f32[1,128]{1,0:T(1,128)}', space=vmem, size = 0x200, scoped, tag = 'scratch operand']
  %s0 = inlined_call_operand.hbm [shape: f32[16,128], index: 0, kind: input, shape index: {}]
  %s1 = inlined_call_operand.hbm [shape: f32[16,128], index: 1, kind: input, shape index: {}]
  %s2 = inlined_call_operand.hbm [shape: f32[1,1], index: 2, kind: output, shape index: {}]
  %s3 = sld [smem:[#allocation0]]
  $region34: #{tpu_custom_call.1} parent=0
    _
  %s5 = ssub.s32 1, %s3
  %s6 = scalar_select 0, %s5, %s3
  $region1: #{tpu_custom_call.1} parent=0
    #allocation3 [shape = 'u8[8192]{0}', space=vmem, size = 0x2000, scoped, tag = 'input window, operand 0, single buffered']
    #allocation4 [shape = 's32[1]{0}', space=sflag, size = 0x4, scoped, tag = 'scoped memory for tpu_custom_call.1']
    #allocation5 [shape = 's32[1]{0}', space=sflag, size = 0x4, scoped, tag = 'scoped memory for tpu_custom_call.1']
    #allocation6 [shape = 'u8[8192]{0}', space=vmem, size = 0x2000, scoped, tag = 'input window, operand 1, single buffered']
    #allocation7 [shape = 's32[1]{0}', space=sflag, size = 0x4, scoped, tag = 'scoped memory for tpu_custom_call.1']
    #allocation8 [shape = 'u8[512]{0}', space=smem, size = 0x200, scoped, tag = 'output window, operand 0, single buffered']
    %7 = vsyncpa [#allocation4], 0
    %8 = vsyncpa [#allocation7], 0
    %9 = vsyncpa [#allocation5], 0
    // Predicated region
    $region2: #{tpu_custom_call.1} parent=1 // pred_check
      _
    $region3: #{tpu_custom_call.1} parent=1 // pred_check_branch
      %11 = sbr.rel (0) target = $region5
    $region4: #{tpu_custom_call.1} parent=1 // pred_region
      %s12 = sadd.s32 0, 0
      %s13 = smul.u32 2, %s12
      %15 = vsyncadd [#allocation4], 0
      %s16 = smul.addr %s13, 8
      %s17 = scalar_lea.hbm %s0, %s16
      %s18 = sshll.u32 %s17, 4
      %s19 = int_to_ptr.hbm [resolvable:$true] %s18
      %s20 = sshll.u32 [#allocation3], 4
      %s21 = int_to_ptr.vmem [resolvable:$true] %s20
      %26 = dma.hbm_to_vmem [thread:$0]  %s19, 256, %s21, [#allocation4], 128, 128, 8
    $region5: #{tpu_custom_call.1} parent=1 // pred_fallthru
      _
    // Predicated region
    $region6: #{tpu_custom_call.1} parent=1 // pred_check
      _
    $region7: #{tpu_custom_call.1} parent=1 // pred_check_branch
      %28 = sbr.rel (0) target = $region9
    $region8: #{tpu_custom_call.1} parent=1 // pred_region
      %s29 = sadd.s32 0, 0
      %s30 = smul.u32 2, %s29
      %32 = vsyncadd [#allocation7], 0
      %s33 = smul.addr %s30, 8
      %s34 = scalar_lea.hbm %s1, %s33
      %s35 = sshll.u32 %s34, 4
      %s36 = int_to_ptr.hbm [resolvable:$true] %s35
      %s37 = sshll.u32 [#allocation6], 4
      %s38 = int_to_ptr.vmem [resolvable:$true] %s37
      %43 = dma.hbm_to_vmem [thread:$0]  %s36, 256, %s38, [#allocation7], 128, 128, 8
    $region9: #{tpu_custom_call.1} parent=1 // pred_fallthru
      _
    // Predicated region
    $region10: #{tpu_custom_call.1} parent=1 // pred_check
      _
    $region11: #{tpu_custom_call.1} parent=1 // pred_check_branch
      %45 = sbr.rel (0) target = $region13
    $region12: #{tpu_custom_call.1} parent=1 // pred_region
      %47 = dma.done [#allocation4], 256
    $region13: #{tpu_custom_call.1} parent=1 // pred_fallthru
      _
    // Predicated region
    $region14: #{tpu_custom_call.1} parent=1 // pred_check
      _
    $region15: #{tpu_custom_call.1} parent=1 // pred_check_branch
      %49 = sbr.rel (0) target = $region17
    $region16: #{tpu_custom_call.1} parent=1 // pred_region
      %51 = dma.done [#allocation7], 256
    $region17: #{tpu_custom_call.1} parent=1 // pred_fallthru
      _
    %s52 = sadd.s32 0, 0
    %s53 = smul.u32 2, %s52
    %s54 = sadd.s32 0, 0
    %s55 = smul.u32 2, %s54
    %p56 = scmp.eq.s32.totalorder 0, 0
    // Predicated region
    $region18: #{tpu_custom_call.1} parent=1 // pred_check
      %p57 = pneg %p56
    $region19: #{tpu_custom_call.1} parent=1 // pred_check_branch
      %59 = sbr.rel (%p57) target = $region21
    $region20: #{tpu_custom_call.1} parent=1 // pred_region
      %60 = vst [vmem:[#allocation2] sm:$0x1] 0.0
    $region21: #{tpu_custom_call.1} parent=1 // pred_fallthru
      _
    %v61 = vld [vmem:[#allocation3] sm:$0xff]
    %v62 = vld [vmem:[#allocation3 + $0x8] sm:$0xff]
    %v63 = vld [vmem:[#allocation6] sm:$0xff]
    %v64 = vld [vmem:[#allocation6 + $0x8] sm:$0xff]
    %v65 = vsub.f32 %v61, %v63
    %v66 = vsub.f32 %v62, %v64
    %v67 = vmul.f32 %v65, %v65
    %v68 = vmul.f32 %v66, %v66
    %v69 = vld [vmem:[#allocation2] sm:$0x1]
    %v70 = vadd.f32 %v67, %v68
    %v71 = vrot.slane %v70, 4
    %v72 = vadd.f32 %v70, %v71
    %v73 = vrot.slane %v72, 2
    %v74 = vadd.f32 %v72, %v73
    %v75 = vrot.slane %v74, 1
    %v76 = vadd.f32 %v74, %v75
    %v77 = vadd.f32 %v69, %v76
    %78 = vst [vmem:[#allocation2] sm:$0x1] %v77
    // Predicated region
    $region22: #{tpu_custom_call.1} parent=1 // pred_check
      %p79 = pneg %p56
    $region23: #{tpu_custom_call.1} parent=1 // pred_check_branch
      %81 = sbr.rel (%p79) target = $region25
    $region24: #{tpu_custom_call.1} parent=1 // pred_region
      %v82 = vld [vmem:[#allocation2] sm:$0x1]
      %vm83 = vcmask 1040384
      %v84 = vsel %vm83, %v82, 0.0
      %85 = vadd.xlane.f32.xlu0 %v84
      %v86 = vpop.xlane.xlu0 %85
      %v87 = vrot.slane %v86, 4
      %v88 = vadd.f32 %v86, %v87
      %v89 = vrot.slane %v88, 2
      %v90 = vadd.f32 %v88, %v89
      %v91 = vrot.slane %v90, 1
      %v92 = vadd.f32 %v90, %v91
      %s93 = vtos %v92
      %s94 = scalar_lea.smem [#allocation8], 0
      %95 = sst [smem:[%s94]] %s93
    $region25: #{tpu_custom_call.1} parent=1 // pred_fallthru
      _
    // Predicated region
    $region26: #{tpu_custom_call.1} parent=1 // pred_check
      _
    $region27: #{tpu_custom_call.1} parent=1 // pred_check_branch
      %97 = sbr.rel (0) target = $region29
    $region28: #{tpu_custom_call.1} parent=1 // pred_region
      %99 = vsyncadd [#allocation5], 0
      %s101 = sshll.u32 %s2, 4
      %s102 = int_to_ptr.hbm [resolvable:$true] %s101
      %104 = dma.smem_to_hbm [#allocation8], 16, %s102, [#allocation5]
    $region29: #{tpu_custom_call.1} parent=1 // pred_fallthru
      _
    // Predicated region
    $region30: #{tpu_custom_call.1} parent=1 // pred_check
      _
    $region31: #{tpu_custom_call.1} parent=1 // pred_check_branch
      %106 = sbr.rel (0) target = $region33
    $region32: #{tpu_custom_call.1} parent=1 // pred_region
      %108 = dma.done [#allocation5], 16
    $region33: #{tpu_custom_call.1} parent=1 // pred_fallthru
      _
    %109 = sfence
    %110 = vsyncpa [#allocation4], 1
    %111 = vsyncpa [#allocation7], 1
    %112 = vsyncpa [#allocation5], 1

</llo_original>
